<compile_context>
chip_gen: v7x
topology: tpu7x:2x2x1
jax: 0.10.0
libtpu: 0.0.40
codegen_flags: <defaults>
</compile_context>

<pallas_src>
import functools

import jax
import jax.numpy as jnp
from jax import lax
from jax.experimental import pallas as pl
from jax.experimental.pallas import tpu as pltpu


def embed_gather_kernel(idx_ref, table_ref, gath_ref, *, B, S, E, V):
    # idx_ref:   (B*S,)       int32, SMEM (scalar prefetch, flat)
    # table_ref: (V, E)       f32, VMEM (full embedding table at toy sizes)
    # gath_ref:  (B_pad, S*E) f32, VMEM output = flattened embeddings (the `view`)
    #
    # TODO(synk): for huge V*E (v7x has 64 MiB VMEM) keep the table in HBM via
    # pl.BlockSpec(memory_space=pl.ANY) and pltpu.make_async_copy only the B*S
    # needed rows instead of holding the whole table in VMEM.
    gath_ref[...] = jnp.zeros_like(gath_ref)  # zero the sublane-pad rows (B_pad > B)
    for b in range(B):
        for s in range(S):
            row = idx_ref[b * S + s]
            # Clamp to avoid undefined OOB VMEM reads on malformed indices.
            # TODO(synk): PyTorch nn.Embedding raises on out-of-range ids; we clamp.
            row = jnp.clip(row, 0, V - 1)
            gath_ref[pl.ds(b, 1), pl.ds(s * E, E)] = table_ref[pl.ds(row, 1), :]


def output_proj_kernel(acts_ref, w_ref, b_ref, out_ref):
    # acts_ref: (B_pad, S*E) f32 (tile-invariant activation slab)
    # w_ref:    (TV, S*E)    f32 (this grid step's vocab tile of Linear W, native layout)
    # b_ref:    (1, TV)      f32 (bias tile)
    # out_ref:  (B_pad, TV)  f32
    # Contract directly over W's last (S*E) dim — MXU consumes W in its native
    # (TV, S*E) layout, no `.T` / XLU relayout per tile.
    out_ref[...] = (
        lax.dot_general(
            acts_ref[...],
            w_ref[...],
            dimension_numbers=(((1,), (1,)), ((), ())),
            preferred_element_type=jnp.float32,
        )
        + b_ref[...]
    )


def train_embeddings_forward(x, embed_table, linear_w, linear_b):
    """x: (B, S) int; embed_table: (V, E); linear_w: (V, S*E) (PyTorch layout); linear_b: (V,)."""
    B, S = x.shape
    V, E = embed_table.shape
    SE = S * E
    assert linear_w.shape == (V, SE)
    assert linear_b.shape == (V,)

    LANE, SUB = 128, 8
    B_pad = pl.cdiv(B, SUB) * SUB                    # full-sublane M dim / unmasked stores
    TV = min(2048, pl.cdiv(V, LANE) * LANE)          # lane-dense vocab tile, up to 2048 wide
    V_pad = pl.cdiv(V, TV) * TV                      # pad vocab to the chosen tile width

    table = jnp.asarray(embed_table, jnp.float32)
    w = jnp.asarray(linear_w, jnp.float32)
    bias = jnp.asarray(linear_b, jnp.float32)
    if V_pad != V:
        # Zero-pad the vocab (lane) dim so matmul N, bias add and output stores
        # are full-width / unmasked; padded columns are sliced off below.
        w = jnp.pad(w, ((0, V_pad - V), (0, 0)))
        bias = jnp.pad(bias, (0, V_pad - V))
    bias2d = bias.reshape(1, V_pad)
    idx_flat = x.reshape(-1).astype(jnp.int32)       # 1D SMEM: avoids 2D SMEM padding

    # ---- Kernel 1: one-shot embedding gather -> flattened (B_pad, S*E) ----
    gathered = pl.pallas_call(
        functools.partial(embed_gather_kernel, B=B, S=S, E=E, V=V),
        out_shape=jax.ShapeDtypeStruct((B_pad, SE), jnp.float32),
        grid_spec=pltpu.PrefetchScalarGridSpec(
            num_scalar_prefetch=1,                   # indices land in SMEM
            grid=(1,),
            in_specs=[
                # Constant index map -> no benefit from double-buffering.
                pl.BlockSpec((V, E), lambda i, idx: (0, 0),
                             pipeline_mode=pl.Buffered(1)),
            ],
            out_specs=pl.BlockSpec((B_pad, SE), lambda i, idx: (0, 0)),
        ),
    )(idx_flat, table)

    # ---- Kernel 2: stream W over lane-dense vocab tiles, one dot per tile ----
    # TODO(synk): when V/E scale, set vmem_limit_bytes here (v5e default scoped
    # VMEM is 16 MiB, v7x physical VMEM is 64 MiB); not needed at toy sizes.
    out_pad = pl.pallas_call(
        output_proj_kernel,
        out_shape=jax.ShapeDtypeStruct((B_pad, V_pad), jnp.float32),
        grid_spec=pltpu.PrefetchScalarGridSpec(
            num_scalar_prefetch=0,
            grid=(V_pad // TV,),
            in_specs=[
                # Tile-invariant activations: loaded once, single buffer.
                pl.BlockSpec((B_pad, SE), lambda j: (0, 0),
                             pipeline_mode=pl.Buffered(1)),
                # W / bias stream is the critical path: triple-buffer it.
                pl.BlockSpec((TV, SE), lambda j: (j, 0),
                             pipeline_mode=pl.Buffered(3)),
                pl.BlockSpec((1, TV), lambda j: (0, j),
                             pipeline_mode=pl.Buffered(3)),
            ],
            out_specs=pl.BlockSpec((B_pad, TV), lambda j: (0, j)),
        ),
        # Vocab tiles are independent -> v7x's second TensorCore can share them.
        compiler_params=pltpu.CompilerParams(
            dimension_semantics=("parallel",)),
    )(gathered, w, bias2d)

    return out_pad[:B, :V]


if __name__ == "__main__":
    # Module hyperparameters (hidden_nodes is unused in the PyTorch forward).
    vocab_size = 32
    embed_size = 16
    seq_len = 8
    batch = 2
    # TODO(synk): hidden_nodes is accepted by TrainEmbeddings.__init__ but never used; omitted.

    key = jax.random.PRNGKey(0)
    k_emb, k_w, k_b, k_x = jax.random.split(key, 4)

    # nn.Embedding init ~ N(0, 1)
    embed_table = jax.random.normal(k_emb, (vocab_size, embed_size), dtype=jnp.float32)
    # nn.Linear init ~ U(-1/sqrt(in_features), 1/sqrt(in_features))
    in_features = embed_size * seq_len
    bound = 1.0 / (in_features ** 0.5)
    linear_w = jax.random.uniform(k_w, (vocab_size, in_features),
                                  minval=-bound, maxval=bound, dtype=jnp.float32)
    linear_b = jax.random.uniform(k_b, (vocab_size,),
                                  minval=-bound, maxval=bound, dtype=jnp.float32)

    x = jax.random.randint(k_x, (batch, seq_len), 0, vocab_size, dtype=jnp.int32)

    out = train_embeddings_forward(x, embed_table, linear_w, linear_b)
    out = jax.block_until_ready(out)

    # Pure-JAX reference of the PyTorch forward.
    ref = jnp.take(embed_table, x, axis=0).reshape(batch, -1) @ linear_w.T + linear_b
    assert out.shape == (batch, vocab_size)
    assert jnp.allclose(out, ref, atol=1e-5, rtol=1e-5), "mismatch vs reference"

    print("KERNEL_OK")
</pallas_src>

<mosaic_0001>
module attributes {stable_mosaic.version = 11 : i64} {
  func.func @embed_gather_kernel(%arg0: i32, %arg1: memref<16xi32, #tpu.memory_space<smem>>, %arg2: memref<32x16xf32, #tpu.memory_space<vmem>>, %arg3: memref<8x128xf32, #tpu.memory_space<vmem>>) attributes {dimension_semantics = [#tpu.dimension_semantics<arbitrary>], iteration_bounds = array<i64: 1>, scalar_prefetch = 1 : i64, scratch_operands = 0 : i64, tpu.core_type = #tpu.core_type<tc>, window_params = [{pipeline_mode = #tpu.pipeline_mode<synchronous>, transform_indices = @transform_0, window_bounds = array<i64: 32, 16>}, {pipeline_mode = #tpu.pipeline_mode<synchronous>, transform_indices = @transform_1, window_bounds = array<i64: 8, 128>}]} {
    %cst = arith.constant 0.000000e+00 : f32
    %0 = vector.broadcast %cst : f32 to vector<8x128xf32>
    %c0 = arith.constant 0 : index
    %c0_0 = arith.constant 0 : index
    %1 = vector.load %arg3[%c0, %c0_0] : memref<8x128xf32, #tpu.memory_space<vmem>>, vector<8x128xf32>
    tpu.vector_store %arg3[%c0, %c0_0], %0 {strides = array<i32>} : memref<8x128xf32, #tpu.memory_space<vmem>>, vector<8x128xf32>,
    %c0_1 = arith.constant 0 : index
    %2 = memref.load %arg1[%c0_1] : memref<16xi32, #tpu.memory_space<smem>>
    %c0_i32 = arith.constant 0 : i32
    %c31_i32 = arith.constant 31 : i32
    %3 = arith.maxsi %c0_i32, %2 : i32
    %4 = arith.minsi %c31_i32, %3 : i32
    %5 = arith.index_cast %4 : i32 to index
    %c0_2 = arith.constant 0 : index
    %6 = vector.load %arg2[%5, %c0_2] : memref<32x16xf32, #tpu.memory_space<vmem>>, vector<1x16xf32>
    %c0_3 = arith.constant 0 : index
    %c0_4 = arith.constant 0 : index
    %7 = vector.load %arg3[%c0_3, %c0_4] : memref<8x128xf32, #tpu.memory_space<vmem>>, vector<1x16xf32>
    tpu.vector_store %arg3[%c0_3, %c0_4], %6 {strides = array<i32>} : memref<8x128xf32, #tpu.memory_space<vmem>>, vector<1x16xf32>,
    %c1 = arith.constant 1 : index
    %8 = memref.load %arg1[%c1] : memref<16xi32, #tpu.memory_space<smem>>
    %c0_i32_5 = arith.constant 0 : i32
    %c31_i32_6 = arith.constant 31 : i32
    %9 = arith.maxsi %c0_i32_5, %8 : i32
    %10 = arith.minsi %c31_i32_6, %9 : i32
    %11 = arith.index_cast %10 : i32 to index
    %c0_7 = arith.constant 0 : index
    %12 = vector.load %arg2[%11, %c0_7] : memref<32x16xf32, #tpu.memory_space<vmem>>, vector<1x16xf32>
    %c0_8 = arith.constant 0 : index
    %c16 = arith.constant 16 : index
    %13 = vector.load %arg3[%c0_8, %c16] : memref<8x128xf32, #tpu.memory_space<vmem>>, vector<1x16xf32>
    tpu.vector_store %arg3[%c0_8, %c16], %12 {strides = array<i32>} : memref<8x128xf32, #tpu.memory_space<vmem>>, vector<1x16xf32>,
    %c2 = arith.constant 2 : index
    %14 = memref.load %arg1[%c2] : memref<16xi32, #tpu.memory_space<smem>>
    %c0_i32_9 = arith.constant 0 : i32
    %c31_i32_10 = arith.constant 31 : i32
    %15 = arith.maxsi %c0_i32_9, %14 : i32
    %16 = arith.minsi %c31_i32_10, %15 : i32
    %17 = arith.index_cast %16 : i32 to index
    %c0_11 = arith.constant 0 : index
    %18 = vector.load %arg2[%17, %c0_11] : memref<32x16xf32, #tpu.memory_space<vmem>>, vector<1x16xf32>
    %c0_12 = arith.constant 0 : index
    %c32 = arith.constant 32 : index
    %19 = vector.load %arg3[%c0_12, %c32] : memref<8x128xf32, #tpu.memory_space<vmem>>, vector<1x16xf32>
    tpu.vector_store %arg3[%c0_12, %c32], %18 {strides = array<i32>} : memref<8x128xf32, #tpu.memory_space<vmem>>, vector<1x16xf32>,
    %c3 = arith.constant 3 : index
    %20 = memref.load %arg1[%c3] : memref<16xi32, #tpu.memory_space<smem>>
    %c0_i32_13 = arith.constant 0 : i32
    %c31_i32_14 = arith.constant 31 : i32
    %21 = arith.maxsi %c0_i32_13, %20 : i32
    %22 = arith.minsi %c31_i32_14, %21 : i32
    %23 = arith.index_cast %22 : i32 to index
    %c0_15 = arith.constant 0 : index
    %24 = vector.load %arg2[%23, %c0_15] : memref<32x16xf32, #tpu.memory_space<vmem>>, vector<1x16xf32>
    %c0_16 = arith.constant 0 : index
    %c48 = arith.constant 48 : index
    %25 = vector.load %arg3[%c0_16, %c48] : memref<8x128xf32, #tpu.memory_space<vmem>>, vector<1x16xf32>
    tpu.vector_store %arg3[%c0_16, %c48], %24 {strides = array<i32>} : memref<8x128xf32, #tpu.memory_space<vmem>>, vector<1x16xf32>,
    %c4 = arith.constant 4 : index
    %26 = memref.load %arg1[%c4] : memref<16xi32, #tpu.memory_space<smem>>
    %c0_i32_17 = arith.constant 0 : i32
    %c31_i32_18 = arith.constant 31 : i32
    %27 = arith.maxsi %c0_i32_17, %26 : i32
    %28 = arith.minsi %c31_i32_18, %27 : i32
    %29 = arith.index_cast %28 : i32 to index
    %c0_19 = arith.constant 0 : index
    %30 = vector.load %arg2[%29, %c0_19] : memref<32x16xf32, #tpu.memory_space<vmem>>, vector<1x16xf32>
    %c0_20 = arith.constant 0 : index
    %c64 = arith.constant 64 : index
    %31 = vector.load %arg3[%c0_20, %c64] : memref<8x128xf32, #tpu.memory_space<vmem>>, vector<1x16xf32>
    tpu.vector_store %arg3[%c0_20, %c64], %30 {strides = array<i32>} : memref<8x128xf32, #tpu.memory_space<vmem>>, vector<1x16xf32>,
    %c5 = arith.constant 5 : index
    %32 = memref.load %arg1[%c5] : memref<16xi32, #tpu.memory_space<smem>>
    %c0_i32_21 = arith.constant 0 : i32
    %c31_i32_22 = arith.constant 31 : i32
    %33 = arith.maxsi %c0_i32_21, %32 : i32
    %34 = arith.minsi %c31_i32_22, %33 : i32
    %35 = arith.index_cast %34 : i32 to index
    %c0_23 = arith.constant 0 : index
    %36 = vector.load %arg2[%35, %c0_23] : memref<32x16xf32, #tpu.memory_space<vmem>>, vector<1x16xf32>
    %c0_24 = arith.constant 0 : index
    %c80 = arith.constant 80 : index
    %37 = vector.load %arg3[%c0_24, %c80] : memref<8x128xf32, #tpu.memory_space<vmem>>, vector<1x16xf32>
    tpu.vector_store %arg3[%c0_24, %c80], %36 {strides = array<i32>} : memref<8x128xf32, #tpu.memory_space<vmem>>, vector<1x16xf32>,
    %c6 = arith.constant 6 : index
    %38 = memref.load %arg1[%c6] : memref<16xi32, #tpu.memory_space<smem>>
    %c0_i32_25 = arith.constant 0 : i32
    %c31_i32_26 = arith.constant 31 : i32
    %39 = arith.maxsi %c0_i32_25, %38 : i32
    %40 = arith.minsi %c31_i32_26, %39 : i32
    %41 = arith.index_cast %40 : i32 to index
    %c0_27 = arith.constant 0 : index
    %42 = vector.load %arg2[%41, %c0_27] : memref<32x16xf32, #tpu.memory_space<vmem>>, vector<1x16xf32>
    %c0_28 = arith.constant 0 : index
    %c96 = arith.constant 96 : index
    %43 = vector.load %arg3[%c0_28, %c96] : memref<8x128xf32, #tpu.memory_space<vmem>>, vector<1x16xf32>
    tpu.vector_store %arg3[%c0_28, %c96], %42 {strides = array<i32>} : memref<8x128xf32, #tpu.memory_space<vmem>>, vector<1x16xf32>,
    %c7 = arith.constant 7 : index
    %44 = memref.load %arg1[%c7] : memref<16xi32, #tpu.memory_space<smem>>
    %c0_i32_29 = arith.constant 0 : i32
    %c31_i32_30 = arith.constant 31 : i32
    %45 = arith.maxsi %c0_i32_29, %44 : i32
    %46 = arith.minsi %c31_i32_30, %45 : i32
    %47 = arith.index_cast %46 : i32 to index
    %c0_31 = arith.constant 0 : index
    %48 = vector.load %arg2[%47, %c0_31] : memref<32x16xf32, #tpu.memory_space<vmem>>, vector<1x16xf32>
    %c0_32 = arith.constant 0 : index
    %c112 = arith.constant 112 : index
    %49 = vector.load %arg3[%c0_32, %c112] : memref<8x128xf32, #tpu.memory_space<vmem>>, vector<1x16xf32>
    tpu.vector_store %arg3[%c0_32, %c112], %48 {strides = array<i32>} : memref<8x128xf32, #tpu.memory_space<vmem>>, vector<1x16xf32>,
    %c8 = arith.constant 8 : index
    %50 = memref.load %arg1[%c8] : memref<16xi32, #tpu.memory_space<smem>>
    %c0_i32_33 = arith.constant 0 : i32
    %c31_i32_34 = arith.constant 31 : i32
    %51 = arith.maxsi %c0_i32_33, %50 : i32
    %52 = arith.minsi %c31_i32_34, %51 : i32
    %53 = arith.index_cast %52 : i32 to index
    %c0_35 = arith.constant 0 : index
    %54 = vector.load %arg2[%53, %c0_35] : memref<32x16xf32, #tpu.memory_space<vmem>>, vector<1x16xf32>
    %c1_36 = arith.constant 1 : index
    %c0_37 = arith.constant 0 : index
    %55 = vector.load %arg3[%c1_36, %c0_37] : memref<8x128xf32, #tpu.memory_space<vmem>>, vector<1x16xf32>
    tpu.vector_store %arg3[%c1_36, %c0_37], %54 {strides = array<i32>} : memref<8x128xf32, #tpu.memory_space<vmem>>, vector<1x16xf32>,
    %c9 = arith.constant 9 : index
    %56 = memref.load %arg1[%c9] : memref<16xi32, #tpu.memory_space<smem>>
    %c0_i32_38 = arith.constant 0 : i32
    %c31_i32_39 = arith.constant 31 : i32
    %57 = arith.maxsi %c0_i32_38, %56 : i32
    %58 = arith.minsi %c31_i32_39, %57 : i32
    %59 = arith.index_cast %58 : i32 to index
    %c0_40 = arith.constant 0 : index
    %60 = vector.load %arg2[%59, %c0_40] : memref<32x16xf32, #tpu.memory_space<vmem>>, vector<1x16xf32>
    %c1_41 = arith.constant 1 : index
    %c16_42 = arith.constant 16 : index
    %61 = vector.load %arg3[%c1_41, %c16_42] : memref<8x128xf32, #tpu.memory_space<vmem>>, vector<1x16xf32>
    tpu.vector_store %arg3[%c1_41, %c16_42], %60 {strides = array<i32>} : memref<8x128xf32, #tpu.memory_space<vmem>>, vector<1x16xf32>,
    %c10 = arith.constant 10 : index
    %62 = memref.load %arg1[%c10] : memref<16xi32, #tpu.memory_space<smem>>
    %c0_i32_43 = arith.constant 0 : i32
    %c31_i32_44 = arith.constant 31 : i32
    %63 = arith.maxsi %c0_i32_43, %62 : i32
    %64 = arith.minsi %c31_i32_44, %63 : i32
    %65 = arith.index_cast %64 : i32 to index
    %c0_45 = arith.constant 0 : index
    %66 = vector.load %arg2[%65, %c0_45] : memref<32x16xf32, #tpu.memory_space<vmem>>, vector<1x16xf32>
    %c1_46 = arith.constant 1 : index
    %c32_47 = arith.constant 32 : index
    %67 = vector.load %arg3[%c1_46, %c32_47] : memref<8x128xf32, #tpu.memory_space<vmem>>, vector<1x16xf32>
    tpu.vector_store %arg3[%c1_46, %c32_47], %66 {strides = array<i32>} : memref<8x128xf32, #tpu.memory_space<vmem>>, vector<1x16xf32>,
    %c11 = arith.constant 11 : index
    %68 = memref.load %arg1[%c11] : memref<16xi32, #tpu.memory_space<smem>>
    %c0_i32_48 = arith.constant 0 : i32
    %c31_i32_49 = arith.constant 31 : i32
    %69 = arith.maxsi %c0_i32_48, %68 : i32
    %70 = arith.minsi %c31_i32_49, %69 : i32
    %71 = arith.index_cast %70 : i32 to index
    %c0_50 = arith.constant 0 : index
    %72 = vector.load %arg2[%71, %c0_50] : memref<32x16xf32, #tpu.memory_space<vmem>>, vector<1x16xf32>
    %c1_51 = arith.constant 1 : index
    %c48_52 = arith.constant 48 : index
    %73 = vector.load %arg3[%c1_51, %c48_52] : memref<8x128xf32, #tpu.memory_space<vmem>>, vector<1x16xf32>
    tpu.vector_store %arg3[%c1_51, %c48_52], %72 {strides = array<i32>} : memref<8x128xf32, #tpu.memory_space<vmem>>, vector<1x16xf32>,
    %c12 = arith.constant 12 : index
    %74 = memref.load %arg1[%c12] : memref<16xi32, #tpu.memory_space<smem>>
    %c0_i32_53 = arith.constant 0 : i32
    %c31_i32_54 = arith.constant 31 : i32
    %75 = arith.maxsi %c0_i32_53, %74 : i32
    %76 = arith.minsi %c31_i32_54, %75 : i32
    %77 = arith.index_cast %76 : i32 to index
    %c0_55 = arith.constant 0 : index
    %78 = vector.load %arg2[%77, %c0_55] : memref<32x16xf32, #tpu.memory_space<vmem>>, vector<1x16xf32>
    %c1_56 = arith.constant 1 : index
    %c64_57 = arith.constant 64 : index
    %79 = vector.load %arg3[%c1_56, %c64_57] : memref<8x128xf32, #tpu.memory_space<vmem>>, vector<1x16xf32>
    tpu.vector_store %arg3[%c1_56, %c64_57], %78 {strides = array<i32>} : memref<8x128xf32, #tpu.memory_space<vmem>>, vector<1x16xf32>,
    %c13 = arith.constant 13 : index
    %80 = memref.load %arg1[%c13] : memref<16xi32, #tpu.memory_space<smem>>
    %c0_i32_58 = arith.constant 0 : i32
    %c31_i32_59 = arith.constant 31 : i32
    %81 = arith.maxsi %c0_i32_58, %80 : i32
    %82 = arith.minsi %c31_i32_59, %81 : i32
    %83 = arith.index_cast %82 : i32 to index
    %c0_60 = arith.constant 0 : index
    %84 = vector.load %arg2[%83, %c0_60] : memref<32x16xf32, #tpu.memory_space<vmem>>, vector<1x16xf32>
    %c1_61 = arith.constant 1 : index
    %c80_62 = arith.constant 80 : index
    %85 = vector.load %arg3[%c1_61, %c80_62] : memref<8x128xf32, #tpu.memory_space<vmem>>, vector<1x16xf32>
    tpu.vector_store %arg3[%c1_61, %c80_62], %84 {strides = array<i32>} : memref<8x128xf32, #tpu.memory_space<vmem>>, vector<1x16xf32>,
    %c14 = arith.constant 14 : index
    %86 = memref.load %arg1[%c14] : memref<16xi32, #tpu.memory_space<smem>>
    %c0_i32_63 = arith.constant 0 : i32
    %c31_i32_64 = arith.constant 31 : i32
    %87 = arith.maxsi %c0_i32_63, %86 : i32
    %88 = arith.minsi %c31_i32_64, %87 : i32
    %89 = arith.index_cast %88 : i32 to index
    %c0_65 = arith.constant 0 : index
    %90 = vector.load %arg2[%89, %c0_65] : memref<32x16xf32, #tpu.memory_space<vmem>>, vector<1x16xf32>
    %c1_66 = arith.constant 1 : index
    %c96_67 = arith.constant 96 : index
    %91 = vector.load %arg3[%c1_66, %c96_67] : memref<8x128xf32, #tpu.memory_space<vmem>>, vector<1x16xf32>
    tpu.vector_store %arg3[%c1_66, %c96_67], %90 {strides = array<i32>} : memref<8x128xf32, #tpu.memory_space<vmem>>, vector<1x16xf32>,
    %c15 = arith.constant 15 : index
    %92 = memref.load %arg1[%c15] : memref<16xi32, #tpu.memory_space<smem>>
    %c0_i32_68 = arith.constant 0 : i32
    %c31_i32_69 = arith.constant 31 : i32
    %93 = arith.maxsi %c0_i32_68, %92 : i32
    %94 = arith.minsi %c31_i32_69, %93 : i32
    %95 = arith.index_cast %94 : i32 to index
    %c0_70 = arith.constant 0 : index
    %96 = vector.load %arg2[%95, %c0_70] : memref<32x16xf32, #tpu.memory_space<vmem>>, vector<1x16xf32>
    %c1_71 = arith.constant 1 : index
    %c112_72 = arith.constant 112 : index
    %97 = vector.load %arg3[%c1_71, %c112_72] : memref<8x128xf32, #tpu.memory_space<vmem>>, vector<1x16xf32>
    tpu.vector_store %arg3[%c1_71, %c112_72], %96 {strides = array<i32>} : memref<8x128xf32, #tpu.memory_space<vmem>>, vector<1x16xf32>,
    return
  }
  func.func @transform_0(%arg0: i32, %arg1: memref<16xi32, #tpu.memory_space<smem>>) -> (i32, i32) {
    %c0_i32 = arith.constant 0 : i32
    %c0_i32_0 = arith.constant 0 : i32
    %c0_i32_1 = arith.constant 0 : i32
    return %c0_i32, %c0_i32_0 : i32, i32
  }
  func.func @transform_1(%arg0: i32, %arg1: memref<16xi32, #tpu.memory_space<smem>>) -> (i32, i32) {
    %c0_i32 = arith.constant 0 : i32
    %c0_i32_0 = arith.constant 0 : i32
    %c0_i32_1 = arith.constant 0 : i32
    return %c0_i32, %c0_i32_0 : i32, i32
  }
}

</mosaic_0001>

<llo_original>
// kernel: tpu_custom_call.1
$region0: #{tpu_custom_call.1}
  #allocation0 [shape = 'u32[]', space=smem, size = 0x4, offset = 0x4, fixed_abs, tag = 'smem constant byte address 0x4 - core index']
  #allocation1 [shape = 'u32[144,128]{1,0:T(1,128)}', space=vmem, size = 0x12000, scoped, tag = 'internal scratch']
  #allocation2 [shape = 's32[1]{0}', space=sflag, size = 0x4, scoped, tag = 'scoped memory for tpu_custom_call.1']
  #allocation3 [shape = 'u8[512]{0}', space=smem, size = 0x200, scoped, tag = 'prefetched SMEM operand 0']
  %s0 = inlined_call_operand.vmem [shape: s32[16], index: 0, kind: input, shape index: {}]
  %s1 = inlined_call_operand.vmem [shape: f32[32,16], index: 1, kind: input, shape index: {}]
  %s2 = inlined_call_operand.hbm [shape: f32[8,128], index: 2, kind: output, shape index: {}]
  %s3 = sld [smem:[#allocation0]]
  $region14: #{tpu_custom_call.1} parent=0
    _
  %s5 = ssub.s32 1, %s3
  %s6 = scalar_select 0, %s5, %s3
  %s7 = sshll.u32 %s0, 4
  %s8 = int_to_ptr.vmem [resolvable:$true] %s7
  %10 = dma.vmem_to_smem %s8, 16, [#allocation3], [#allocation2]
  %11 = dma.done [#allocation2], 16
  %12 = sfence
  $region1: #{tpu_custom_call.1} parent=0
    #allocation4 [shape = 'u8[4096]{0}', space=vmem, size = 0x1000, scoped, tag = 'output window, operand 0, single buffered']
    #allocation5 [shape = 's32[1]{0}', space=sflag, size = 0x4, scoped, tag = 'scoped memory for tpu_custom_call.1']
    %13 = vsyncpa [#allocation5], 0
    // Predicated region
    $region2: #{tpu_custom_call.1} parent=1 // pred_check
      _
    $region3: #{tpu_custom_call.1} parent=1 // pred_check_branch
      %15 = sbr.rel (0) target = $region5
    $region4: #{tpu_custom_call.1} parent=1 // pred_region
      _
    $region5: #{tpu_custom_call.1} parent=1 // pred_fallthru
      _
    %16 = vst [vmem:[#allocation4] sm:$0xff] 0.0
    %s17 = sld [smem:[#allocation3]]
    %p18 = scmp.gt.s32.totalorder %s17, 0
    %s19 = scalar_select %p18, %s17, 0
    %p20 = scmp.lt.s32.totalorder %s19, 31
    %s21 = scalar_select %p20, %s19, 31
    %s22 = scalar_lea.vmem %s1, %s21
    %v23 = vld [vmem:[%s22] sm:$0x1]
    %vm24 = vcmask 122880
    %25 = vst.msk [vmem:[#allocation4] sm:$0x1] %vm24, %v23
    %s26 = sld [smem:[#allocation3 + $0x1]]
    %p27 = scmp.gt.s32.totalorder %s26, 0
    %s28 = scalar_select %p27, %s26, 0
    %p29 = scmp.lt.s32.totalorder %s28, 31
    %s30 = scalar_select %p29, %s28, 31
    %s31 = scalar_lea.vmem %s1, %s30
    %v32 = vld [vmem:[%s31] sm:$0x1]
    %34 = vrot.lane.b32.xlu0 %v32, 16
    %v35 = vpop.permute.xlu0 %34
    %vm37 = vcmask 254080
    %38 = vst.msk [vmem:[#allocation4] sm:$0x1] %vm37, %v35
    %s39 = sld [smem:[#allocation3 + $0x2]]
    %p40 = scmp.gt.s32.totalorder %s39, 0
    %s41 = scalar_select %p40, %s39, 0
    %p42 = scmp.lt.s32.totalorder %s41, 31
    %s43 = scalar_select %p42, %s41, 31
    %s44 = scalar_lea.vmem %s1, %s43
    %v45 = vld [vmem:[%s44] sm:$0x1]
    %47 = vrot.lane.b32.xlu0 %v45, 32
    %v48 = vpop.permute.xlu0 %47
    %vm50 = vcmask 385280
    %51 = vst.msk [vmem:[#allocation4] sm:$0x1] %vm50, %v48
    %s52 = sld [smem:[#allocation3 + $0x3]]
    %p53 = scmp.gt.s32.totalorder %s52, 0
    %s54 = scalar_select %p53, %s52, 0
    %p55 = scmp.lt.s32.totalorder %s54, 31
    %s56 = scalar_select %p55, %s54, 31
    %s57 = scalar_lea.vmem %s1, %s56
    %v58 = vld [vmem:[%s57] sm:$0x1]
    %60 = vrot.lane.b32.xlu0 %v58, 48
    %v61 = vpop.permute.xlu0 %60
    %vm63 = vcmask 516480
    %64 = vst.msk [vmem:[#allocation4] sm:$0x1] %vm63, %v61
    %s65 = sld [smem:[#allocation3 + $0x4]]
    %p66 = scmp.gt.s32.totalorder %s65, 0
    %s67 = scalar_select %p66, %s65, 0
    %p68 = scmp.lt.s32.totalorder %s67, 31
    %s69 = scalar_select %p68, %s67, 31
    %s70 = scalar_lea.vmem %s1, %s69
    %v71 = vld [vmem:[%s70] sm:$0x1]
    %73 = vrot.lane.b32.xlu0 %v71, 64
    %v74 = vpop.permute.xlu0 %73
    %vm76 = vcmask 647680
    %77 = vst.msk [vmem:[#allocation4] sm:$0x1] %vm76, %v74
    %s78 = sld [smem:[#allocation3 + $0x5]]
    %p79 = scmp.gt.s32.totalorder %s78, 0
    %s80 = scalar_select %p79, %s78, 0
    %p81 = scmp.lt.s32.totalorder %s80, 31
    %s82 = scalar_select %p81, %s80, 31
    %s83 = scalar_lea.vmem %s1, %s82
    %v84 = vld [vmem:[%s83] sm:$0x1]
    %86 = vrot.lane.b32.xlu0 %v84, 80
    %v87 = vpop.permute.xlu0 %86
    %vm89 = vcmask 778880
    %90 = vst.msk [vmem:[#allocation4] sm:$0x1] %vm89, %v87
    %s91 = sld [smem:[#allocation3 + $0x6]]
    %p92 = scmp.gt.s32.totalorder %s91, 0
    %s93 = scalar_select %p92, %s91, 0
    %p94 = scmp.lt.s32.totalorder %s93, 31
    %s95 = scalar_select %p94, %s93, 31
    %s96 = scalar_lea.vmem %s1, %s95
    %v97 = vld [vmem:[%s96] sm:$0x1]
    %99 = vrot.lane.b32.xlu0 %v97, 96
    %v100 = vpop.permute.xlu0 %99
    %vm102 = vcmask 910080
    %103 = vst.msk [vmem:[#allocation4] sm:$0x1] %vm102, %v100
    %s104 = sld [smem:[#allocation3 + $0x7]]
    %p105 = scmp.gt.s32.totalorder %s104, 0
    %s106 = scalar_select %p105, %s104, 0
    %p107 = scmp.lt.s32.totalorder %s106, 31
    %s108 = scalar_select %p107, %s106, 31
    %s109 = scalar_lea.vmem %s1, %s108
    %v110 = vld [vmem:[%s109] sm:$0x1]
    %112 = vrot.lane.b32.xlu0 %v110, 112
    %v113 = vpop.permute.xlu0 %112
    %vm115 = vcmask 1041280
    %116 = vst.msk [vmem:[#allocation4] sm:$0x1] %vm115, %v113
    %s117 = sld [smem:[#allocation3 + $0x8]]
    %p118 = scmp.gt.s32.totalorder %s117, 0
    %s119 = scalar_select %p118, %s117, 0
    %p120 = scmp.lt.s32.totalorder %s119, 31
    %s121 = scalar_select %p120, %s119, 31
    %s122 = scalar_lea.vmem %s1, %s121
    %v123 = vld [vmem:[%s122] sm:$0x1]
    %124 = vst.msk [vmem:[#allocation4 + $0x1] sm:$0x1] %vm24, %v123
    %s125 = sld [smem:[#allocation3 + $0x9]]
    %p126 = scmp.gt.s32.totalorder %s125, 0
    %s127 = scalar_select %p126, %s125, 0
    %p128 = scmp.lt.s32.totalorder %s127, 31
    %s129 = scalar_select %p128, %s127, 31
    %s130 = scalar_lea.vmem %s1, %s129
    %v131 = vld [vmem:[%s130] sm:$0x1]
    %133 = vrot.lane.b32.xlu0 %v131, 16
    %v134 = vpop.permute.xlu0 %133
    %136 = vst.msk [vmem:[#allocation4 + $0x1] sm:$0x1] %vm37, %v134
    %s137 = sld [smem:[#allocation3 + $0xa]]
    %p138 = scmp.gt.s32.totalorder %s137, 0
    %s139 = scalar_select %p138, %s137, 0
    %p140 = scmp.lt.s32.totalorder %s139, 31
    %s141 = scalar_select %p140, %s139, 31
    %s142 = scalar_lea.vmem %s1, %s141
    %v143 = vld [vmem:[%s142] sm:$0x1]
    %145 = vrot.lane.b32.xlu0 %v143, 32
    %v146 = vpop.permute.xlu0 %145
    %148 = vst.msk [vmem:[#allocation4 + $0x1] sm:$0x1] %vm50, %v146
    %s149 = sld [smem:[#allocation3 + $0xb]]
    %p150 = scmp.gt.s32.totalorder %s149, 0
    %s151 = scalar_select %p150, %s149, 0
    %p152 = scmp.lt.s32.totalorder %s151, 31
    %s153 = scalar_select %p152, %s151, 31
    %s154 = scalar_lea.vmem %s1, %s153
    %v155 = vld [vmem:[%s154] sm:$0x1]
    %157 = vrot.lane.b32.xlu0 %v155, 48
    %v158 = vpop.permute.xlu0 %157
    %160 = vst.msk [vmem:[#allocation4 + $0x1] sm:$0x1] %vm63, %v158
    %s161 = sld [smem:[#allocation3 + $0xc]]
    %p162 = scmp.gt.s32.totalorder %s161, 0
    %s163 = scalar_select %p162, %s161, 0
    %p164 = scmp.lt.s32.totalorder %s163, 31
    %s165 = scalar_select %p164, %s163, 31
    %s166 = scalar_lea.vmem %s1, %s165
    %v167 = vld [vmem:[%s166] sm:$0x1]
    %169 = vrot.lane.b32.xlu0 %v167, 64
    %v170 = vpop.permute.xlu0 %169
    %172 = vst.msk [vmem:[#allocation4 + $0x1] sm:$0x1] %vm76, %v170
    %s173 = sld [smem:[#allocation3 + $0xd]]
    %p174 = scmp.gt.s32.totalorder %s173, 0
    %s175 = scalar_select %p174, %s173, 0
    %p176 = scmp.lt.s32.totalorder %s175, 31
    %s177 = scalar_select %p176, %s175, 31
    %s178 = scalar_lea.vmem %s1, %s177
    %v179 = vld [vmem:[%s178] sm:$0x1]
    %181 = vrot.lane.b32.xlu0 %v179, 80
    %v182 = vpop.permute.xlu0 %181
    %184 = vst.msk [vmem:[#allocation4 + $0x1] sm:$0x1] %vm89, %v182
    %s185 = sld [smem:[#allocation3 + $0xe]]
    %p186 = scmp.gt.s32.totalorder %s185, 0
    %s187 = scalar_select %p186, %s185, 0
    %p188 = scmp.lt.s32.totalorder %s187, 31
    %s189 = scalar_select %p188, %s187, 31
    %s190 = scalar_lea.vmem %s1, %s189
    %v191 = vld [vmem:[%s190] sm:$0x1]
    %193 = vrot.lane.b32.xlu0 %v191, 96
    %v194 = vpop.permute.xlu0 %193
    %196 = vst.msk [vmem:[#allocation4 + $0x1] sm:$0x1] %vm102, %v194
    %s197 = sld [smem:[#allocation3 + $0xf]]
    %p198 = scmp.gt.s32.totalorder %s197, 0
    %s199 = scalar_select %p198, %s197, 0
    %p200 = scmp.lt.s32.totalorder %s199, 31
    %s201 = scalar_select %p200, %s199, 31
    %s202 = scalar_lea.vmem %s1, %s201
    %v203 = vld [vmem:[%s202] sm:$0x1]
    %205 = vrot.lane.b32.xlu0 %v203, 112
    %v206 = vpop.permute.xlu0 %205
    %208 = vst.msk [vmem:[#allocation4 + $0x1] sm:$0x1] %vm115, %v206
    // Predicated region
    $region6: #{tpu_custom_call.1} parent=1 // pred_check
      _
    $region7: #{tpu_custom_call.1} parent=1 // pred_check_branch
      %210 = sbr.rel (0) target = $region9
    $region8: #{tpu_custom_call.1} parent=1 // pred_region
      %s212 = ssub.s32 128, 128
      %213 = vsyncadd [#allocation5], %s212
      %s215 = sshll.u32 [#allocation4], 4
      %s216 = int_to_ptr.vmem [resolvable:$true] %s215
      %218 = dma.vmem_to_hbm [thread:$0]  %s216, 128, %s2, [#allocation5]
    $region9: #{tpu_custom_call.1} parent=1 // pred_fallthru
      _
    // Predicated region
    $region10: #{tpu_custom_call.1} parent=1 // pred_check
      _
    $region11: #{tpu_custom_call.1} parent=1 // pred_check_branch
      %220 = sbr.rel (0) target = $region13
    $region12: #{tpu_custom_call.1} parent=1 // pred_region
      %221 = dma.done [#allocation5], 128
    $region13: #{tpu_custom_call.1} parent=1 // pred_fallthru
      _
    %222 = vsyncpa [#allocation5], 1

</llo_original>
